<compile_context>
chip_gen: v6e
topology: v6e:2x2x1
jax: 0.10.0
libtpu: 0.0.40
codegen_flags: <defaults>
</compile_context>

<pallas_src>
import string

import jax
import jax.numpy as jnp
from jax.experimental import pallas as pl
from jax.experimental.pallas import tpu as pltpu

INPUT_SIZE = len(string.printable.strip()) + 4   # 94 printable chars + 4 = 98
HIDDEN = 128
OUT = 1


def _round_up(n, m):
    return ((n + m - 1) // m) * m


def _mlp_kernel(x_ref, w1_ref, b1_ref, w2_ref, b2_ref, w3_ref, b3_ref, o_ref):
    # x tile: (tile, 98), f32 or bf16 straight from HBM; cast to bf16 on the VPU.
    x = x_ref[...].astype(jnp.bfloat16)

    # layer_1 + ReLU (dropout = identity in eval mode).  K=98 contraction; the
    # unaligned remainder is masked by Mosaic, so no 98->128 zero pad needed.
    h1 = jnp.dot(x, w1_ref[...], preferred_element_type=jnp.float32) + b1_ref[...]
    h1 = jnp.maximum(h1, 0.0)

    # layer_2 + ReLU (dropout = identity in eval mode).
    h2 = jnp.dot(h1.astype(jnp.bfloat16), w2_ref[...],
                 preferred_element_type=jnp.float32) + b2_ref[...]
    h2 = jnp.maximum(h2, 0.0)

    # layer_out (out_features == 1): MXU "NT" matmul of the (1,128) w3 row
    # against h2 contracting the last dims -> lane-dense (1, tile) logits row
    # (no XLU lane-reduce, no (tile,1)->(1,tile) relayout).  Bias from SMEM.
    logits = jax.lax.dot_general(
        w3_ref[...], h2.astype(jnp.bfloat16),
        dimension_numbers=(((1,), (1,)), ((), ())),
        preferred_element_type=jnp.float32) + b3_ref[0]           # (1, tile)

    # sigmoid: exp and approximate reciprocal both run on the EUP slot.
    o_ref[...] = pl.reciprocal(1.0 + jnp.exp(-logits), approx=True).astype(o_ref.dtype)


def prepare_params(params):
    """One-time (model-load) conversion of natural-layout params to kernel layout."""
    w1, b1, w2, b2, w3, b3 = params
    w1p = w1.astype(jnp.bfloat16)                      # (98, 128), MXU-native rate
    w2p = w2.astype(jnp.bfloat16)                      # (128, 128)
    b1p = b1.reshape(1, HIDDEN).astype(jnp.float32)
    b2p = b2.reshape(1, HIDDEN).astype(jnp.float32)
    w3p = w3.reshape(1, HIDDEN).astype(jnp.bfloat16)   # row form for the NT epilogue matmul
    b3p = b3.reshape(1,).astype(jnp.float32)           # SMEM scalar
    return w1p, b1p, w2p, b2p, w3p, b3p


def dns_detector_forward(x, prepared_params, *, batch_tile=4096):
    """x: (B, 98) float32 (or bfloat16). Returns (B, 1) float32 sigmoid probabilities."""
    B, F = x.shape
    assert F == INPUT_SIZE
    w1p, b1p, w2p, b2p, w3p, b3p = prepared_params

    if B <= batch_tile:
        # One grid step: full-shape blocks are always legal, so no padding and
        # no wrapper-side copy of x at all.
        tile, b_pad, xk = B, B, x
    else:
        assert batch_tile % 128 == 0, "batch_tile must be a multiple of 128"
        # Large batch: big tiles amortize the per-step overhead, but cap the
        # tile so the grid has >= 2 steps (v7x megacore can shard the batch).
        tile = min(batch_tile, _round_up(-(-B // 2), 128))
        b_pad = _round_up(B, tile)
        if b_pad == B:
            xk = x                                   # fast path: zero wrapper copies
        else:
            # Remainder rows only; cast+pad in one op (bf16 halves the write).
            # TODO(synk): drop this copy via boundary-block masking / input fusion.
            xk = jnp.pad(x.astype(jnp.bfloat16), ((0, b_pad - B), (0, 0)))

    grid = (b_pad // tile,)

    out = pl.pallas_call(
        _mlp_kernel,
        out_shape=jax.ShapeDtypeStruct((1, b_pad), jnp.float32),
        grid_spec=pltpu.PrefetchScalarGridSpec(
            num_scalar_prefetch=0,
            grid=grid,
            in_specs=[
                pl.BlockSpec((tile, INPUT_SIZE), lambda i: (i, 0)),    # x tile (raw, unpadded K=98)
                pl.BlockSpec((INPUT_SIZE, HIDDEN), lambda i: (0, 0)),  # w1 (bf16, resident)
                pl.BlockSpec((1, HIDDEN), lambda i: (0, 0)),           # b1 (f32)
                pl.BlockSpec((HIDDEN, HIDDEN), lambda i: (0, 0)),      # w2 (bf16, resident)
                pl.BlockSpec((1, HIDDEN), lambda i: (0, 0)),           # b2 (f32)
                pl.BlockSpec((1, HIDDEN), lambda i: (0, 0)),           # w3 row (bf16)
                pl.BlockSpec(memory_space=pltpu.MemorySpace.SMEM),     # b3 scalar (f32)
            ],
            out_specs=pl.BlockSpec((1, tile), lambda i: (0, i)),       # lane-dense output row
        ),
        compiler_params=pltpu.CompilerParams(
            dimension_semantics=("parallel",),        # batch axis shardable across TCs
            vmem_limit_bytes=32 * 1024 * 1024,        # headroom over v5e's 16 MiB default
        ),
    )(xk, w1p, b1p, w2p, b2p, w3p, b3p)

    return out[0, :B].reshape(B, 1)


def init_params(key):
    """PyTorch-nn.Linear-like init; weights stored (in, out) so forward is x @ W."""
    k1, k2, k3, k4, k5, k6 = jax.random.split(key, 6)

    def lin(kw, kb, fan_in, fan_out):
        bound = 1.0 / jnp.sqrt(jnp.float32(fan_in))
        w = jax.random.uniform(kw, (fan_in, fan_out), jnp.float32, -bound, bound)
        b = jax.random.uniform(kb, (fan_out,), jnp.float32, -bound, bound)
        return w, b

    w1, b1 = lin(k1, k2, INPUT_SIZE, HIDDEN)
    w2, b2 = lin(k3, k4, HIDDEN, HIDDEN)
    w3, b3 = lin(k5, k6, HIDDEN, OUT)
    return (w1, b1, w2, b2, w3, b3)


def _reference_forward(x, params):
    w1, b1, w2, b2, w3, b3 = params
    h1 = jnp.maximum(x @ w1 + b1, 0.0)
    h2 = jnp.maximum(h1 @ w2 + b2, 0.0)
    return jax.nn.sigmoid(h2 @ w3 + b3)


if __name__ == "__main__":
    key = jax.random.PRNGKey(0)
    kx, kp = jax.random.split(key)
    params = init_params(kp)
    prepared = prepare_params(params)        # hoisted: once per model load

    # Case 1: tiny batch -> single-tile path, full-shape blocks, no padding.
    x_small = jax.random.normal(kx, (16, INPUT_SIZE), jnp.float32)
    out_small = jax.block_until_ready(dns_detector_forward(x_small, prepared))
    ref_small = _reference_forward(x_small, params)
    assert out_small.shape == (16, OUT)
    assert jnp.allclose(out_small, ref_small, atol=2e-2, rtol=0.0), "mismatch (small)"

    # Case 2: multi-tile path, batch divides the tile -> zero wrapper copies (grid=2).
    x_mid = jax.random.normal(kx, (256, INPUT_SIZE), jnp.float32)
    out_mid = jax.block_until_ready(
        dns_detector_forward(x_mid, prepared, batch_tile=128))
    ref_mid = _reference_forward(x_mid, params)
    assert out_mid.shape == (256, OUT)
    assert jnp.allclose(out_mid, ref_mid, atol=2e-2, rtol=0.0), "mismatch (mid)"

    # Case 3: multi-tile path with a non-divisible batch (remainder pad fallback, grid=3).
    x_big = jax.random.normal(kx, (300, INPUT_SIZE), jnp.float32)
    out_big = jax.block_until_ready(
        dns_detector_forward(x_big, prepared, batch_tile=128))
    ref_big = _reference_forward(x_big, params)
    assert out_big.shape == (300, OUT)
    assert jnp.allclose(out_big, ref_big, atol=2e-2, rtol=0.0), "mismatch (big)"

    print("KERNEL_OK")
</pallas_src>

<mosaic_0001>
module attributes {stable_mosaic.version = 11 : i64} {
  func.func @_mlp_kernel(%arg0: i32, %arg1: memref<16x98xf32, #tpu.memory_space<vmem>>, %arg2: memref<98x128xbf16, #tpu.memory_space<vmem>>, %arg3: memref<1x128xf32, #tpu.memory_space<vmem>>, %arg4: memref<128x128xbf16, #tpu.memory_space<vmem>>, %arg5: memref<1x128xf32, #tpu.memory_space<vmem>>, %arg6: memref<1x128xbf16, #tpu.memory_space<vmem>>, %arg7: memref<1xf32, #tpu.memory_space<smem>>, %arg8: memref<1x16xf32, #tpu.memory_space<vmem>>) attributes {dimension_semantics = [#tpu.dimension_semantics<parallel>], iteration_bounds = array<i64: 1>, scalar_prefetch = 0 : i64, scratch_operands = 0 : i64, tpu.core_type = #tpu.core_type<tc>, window_params = [{transform_indices = @transform_0, window_bounds = array<i64: 16, 98>}, {pipeline_mode = #tpu.pipeline_mode<synchronous>, transform_indices = @transform_1, window_bounds = array<i64: 98, 128>}, {pipeline_mode = #tpu.pipeline_mode<synchronous>, transform_indices = @transform_2, window_bounds = array<i64: 1, 128>}, {pipeline_mode = #tpu.pipeline_mode<synchronous>, transform_indices = @transform_3, window_bounds = array<i64: 128, 128>}, {pipeline_mode = #tpu.pipeline_mode<synchronous>, transform_indices = @transform_4, window_bounds = array<i64: 1, 128>}, {pipeline_mode = #tpu.pipeline_mode<synchronous>, transform_indices = @transform_5, window_bounds = array<i64: 1, 128>}, {transform_indices = @transform_6, window_bounds = array<i64: 1>}, {transform_indices = @transform_7, window_bounds = array<i64: 1, 16>}]} {
    %c0 = arith.constant 0 : index
    %c0_0 = arith.constant 0 : index
    %0 = vector.load %arg1[%c0, %c0_0] : memref<16x98xf32, #tpu.memory_space<vmem>>, vector<16x98xf32>
    %1 = arith.truncf %0 : vector<16x98xf32> to vector<16x98xbf16>
    %c0_1 = arith.constant 0 : index
    %c0_2 = arith.constant 0 : index
    %2 = vector.load %arg2[%c0_1, %c0_2] : memref<98x128xbf16, #tpu.memory_space<vmem>>, vector<98x128xbf16>
    %cst = arith.constant dense<0.000000e+00> : vector<16x128xf32>
    %3 = tpu.matmul %1, %2, %cst {dimension_numbers = #tpu.dot_dimension_numbers<[1], [0], [0], [1], [0, 0, 1, 1], [], []>} : vector<16x98xbf16>, vector<98x128xbf16>, vector<16x128xf32> -> vector<16x128xf32>
    %c0_3 = arith.constant 0 : index
    %c0_4 = arith.constant 0 : index
    %4 = vector.load %arg3[%c0_3, %c0_4] : memref<1x128xf32, #tpu.memory_space<vmem>>, vector<1x128xf32>
    %5 = vector.broadcast %4 : vector<1x128xf32> to vector<16x128xf32>
    %6 = arith.addf %3, %5 : vector<16x128xf32>
    %cst_5 = arith.constant 0.000000e+00 : f32
    %7 = vector.broadcast %cst_5 : f32 to vector<16x128xf32>
    %8 = arith.maximumf %6, %7 : vector<16x128xf32>
    %9 = arith.truncf %8 : vector<16x128xf32> to vector<16x128xbf16>
    %c0_6 = arith.constant 0 : index
    %c0_7 = arith.constant 0 : index
    %10 = vector.load %arg4[%c0_6, %c0_7] : memref<128x128xbf16, #tpu.memory_space<vmem>>, vector<128x128xbf16>
    %cst_8 = arith.constant dense<0.000000e+00> : vector<16x128xf32>
    %11 = tpu.matmul %9, %10, %cst_8 {dimension_numbers = #tpu.dot_dimension_numbers<[1], [0], [0], [1], [0, 0, 1, 1], [], []>} : vector<16x128xbf16>, vector<128x128xbf16>, vector<16x128xf32> -> vector<16x128xf32>
    %c0_9 = arith.constant 0 : index
    %c0_10 = arith.constant 0 : index
    %12 = vector.load %arg5[%c0_9, %c0_10] : memref<1x128xf32, #tpu.memory_space<vmem>>, vector<1x128xf32>
    %13 = vector.broadcast %12 : vector<1x128xf32> to vector<16x128xf32>
    %14 = arith.addf %11, %13 : vector<16x128xf32>
    %cst_11 = arith.constant 0.000000e+00 : f32
    %15 = vector.broadcast %cst_11 : f32 to vector<16x128xf32>
    %16 = arith.maximumf %14, %15 : vector<16x128xf32>
    %c0_12 = arith.constant 0 : index
    %c0_13 = arith.constant 0 : index
    %17 = vector.load %arg6[%c0_12, %c0_13] : memref<1x128xbf16, #tpu.memory_space<vmem>>, vector<1x128xbf16>
    %18 = arith.truncf %16 : vector<16x128xf32> to vector<16x128xbf16>
    %cst_14 = arith.constant dense<0.000000e+00> : vector<1x16xf32>
    %19 = tpu.matmul %17, %18, %cst_14 {dimension_numbers = #tpu.dot_dimension_numbers<[1], [1], [0], [0], [0, 0, 1, 0], [], []>} : vector<1x128xbf16>, vector<16x128xbf16>, vector<1x16xf32> -> vector<1x16xf32>
    %c0_15 = arith.constant 0 : index
    %20 = memref.load %arg7[%c0_15] : memref<1xf32, #tpu.memory_space<smem>>
    %21 = vector.broadcast %20 : f32 to vector<1x16xf32>
    %22 = arith.addf %19, %21 : vector<1x16xf32>
    %cst_16 = arith.constant 0.000000e+00 : f32
    %23 = vector.broadcast %cst_16 : f32 to vector<1x16xf32>
    %24 = arith.subf %23, %22 : vector<1x16xf32>
    %25 = math.exp %24 : vector<1x16xf32>
    %cst_17 = arith.constant 1.000000e+00 : f32
    %26 = vector.broadcast %cst_17 : f32 to vector<1x16xf32>
    %27 = arith.addf %26, %25 : vector<1x16xf32>
    %28 = tpu.reciprocal %27 {approx = true} : vector<1x16xf32> -> vector<1x16xf32>
    %c0_18 = arith.constant 0 : index
    %c0_19 = arith.constant 0 : index
    %29 = vector.load %arg8[%c0_18, %c0_19] : memref<1x16xf32, #tpu.memory_space<vmem>>, vector<1x16xf32>
    tpu.vector_store %arg8[%c0_18, %c0_19], %28 {strides = array<i32>} : memref<1x16xf32, #tpu.memory_space<vmem>>, vector<1x16xf32>,
    return
  }
  func.func @transform_0(%arg0: i32) -> (i32, i32) {
    %c0_i32 = arith.constant 0 : i32
    %c0_i32_0 = arith.constant 0 : i32
    return %arg0, %c0_i32 : i32, i32
  }
  func.func @transform_1(%arg0: i32) -> (i32, i32) {
    %c0_i32 = arith.constant 0 : i32
    %c0_i32_0 = arith.constant 0 : i32
    %c0_i32_1 = arith.constant 0 : i32
    return %c0_i32, %c0_i32_0 : i32, i32
  }
  func.func @transform_2(%arg0: i32) -> (i32, i32) {
    %c0_i32 = arith.constant 0 : i32
    %c0_i32_0 = arith.constant 0 : i32
    %c0_i32_1 = arith.constant 0 : i32
    return %c0_i32, %c0_i32_0 : i32, i32
  }
  func.func @transform_3(%arg0: i32) -> (i32, i32) {
    %c0_i32 = arith.constant 0 : i32
    %c0_i32_0 = arith.constant 0 : i32
    %c0_i32_1 = arith.constant 0 : i32
    return %c0_i32, %c0_i32_0 : i32, i32
  }
  func.func @transform_4(%arg0: i32) -> (i32, i32) {
    %c0_i32 = arith.constant 0 : i32
    %c0_i32_0 = arith.constant 0 : i32
    %c0_i32_1 = arith.constant 0 : i32
    return %c0_i32, %c0_i32_0 : i32, i32
  }
  func.func @transform_5(%arg0: i32) -> (i32, i32) {
    %c0_i32 = arith.constant 0 : i32
    %c0_i32_0 = arith.constant 0 : i32
    %c0_i32_1 = arith.constant 0 : i32
    return %c0_i32, %c0_i32_0 : i32, i32
  }
  func.func @transform_6(%arg0: i32) -> i32 {
    %c0_i32 = arith.constant 0 : i32
    %c0_i32_0 = arith.constant 0 : i32
    return %c0_i32 : i32
  }
  func.func @transform_7(%arg0: i32) -> (i32, i32) {
    %c0_i32 = arith.constant 0 : i32
    %c0_i32_0 = arith.constant 0 : i32
    return %c0_i32, %arg0 : i32, i32
  }
}

</mosaic_0001>

<llo_original>
// kernel: tpu_custom_call.1
$region0: #{tpu_custom_call.1}
  #allocation0 [shape = 'u32[]', space=smem, size = 0x4, offset = 0x4, fixed_abs, tag = 'smem constant byte address 0x4 - core index']
  #allocation1 [shape = 'u32[144,128]{1,0:T(1,128)}', space=vmem, size = 0x12000, scoped, tag = 'internal scratch']
  #allocation2 [shape = 'f32[1]{0:T(128)S(6)}', space=smem, size = 0x200, scoped, tag = 'scoped memory for tpu_custom_call.1']
  %s0 = inlined_call_operand.hbm [shape: f32[16,98], index: 0, kind: input, shape index: {}]
  %s1 = inlined_call_operand.hbm [shape: bf16[98,128], index: 1, kind: input, shape index: {}]
  %s2 = inlined_call_operand.vmem [shape: f32[1,128], index: 2, kind: input, shape index: {}]
  %s3 = inlined_call_operand.hbm [shape: bf16[128,128], index: 3, kind: input, shape index: {}]
  %s4 = inlined_call_operand.vmem [shape: f32[1,128], index: 4, kind: input, shape index: {}]
  %s5 = inlined_call_operand.vmem [shape: bf16[1,128], index: 5, kind: input, shape index: {}]
  %s6 = inlined_call_operand.<no memory space> [shape: f32[1], index: 6, kind: input, shape index: {}]
  %s7 = inlined_call_operand.hbm [shape: f32[1,16], index: 7, kind: output, shape index: {}]
  %s8 = sld [smem:[#allocation0]]
  $region50: #{tpu_custom_call.1} parent=0
    _
  %s10 = ssub.s32 1, %s8
  %s11 = scalar_select 0, %s10, %s8
  %12 = sst [smem:[#allocation2]] %s6
  $region1: #{tpu_custom_call.1} parent=0
    #allocation3 [shape = 'u8[8192]{0}', space=vmem, size = 0x2000, scoped, tag = 'input window, operand 0, single buffered']
    #allocation4 [shape = 's32[1]{0}', space=sflag, size = 0x4, scoped, tag = 'scoped memory for tpu_custom_call.1']
    #allocation5 [shape = 's32[1]{0}', space=sflag, size = 0x4, scoped, tag = 'scoped memory for tpu_custom_call.1']
    #allocation6 [shape = 'u8[26624]{0}', space=vmem, size = 0x6800, scoped, tag = 'input window, operand 1, single buffered']
    #allocation7 [shape = 's32[1]{0}', space=sflag, size = 0x4, scoped, tag = 'scoped memory for tpu_custom_call.1']
    #allocation8 [shape = 'u8[32768]{0}', space=vmem, size = 0x8000, scoped, tag = 'input window, operand 3, single buffered']
    #allocation9 [shape = 'u8[512]{0}', space=vmem, size = 0x400, scoped, tag = 'output window, operand 0, single buffered']
    %13 = vsyncpa [#allocation4], 0
    %14 = vsyncpa [#allocation7], 0
    %15 = vsyncpa [#allocation5], 0
    // Predicated region
    $region2: #{tpu_custom_call.1} parent=1 // pred_check
      _
    $region3: #{tpu_custom_call.1} parent=1 // pred_check_branch
      %17 = sbr.rel (0) target = $region5
    $region4: #{tpu_custom_call.1} parent=1 // pred_region
      %s19 = ssub.s32 256, 256
      %20 = vsyncadd [#allocation4], %s19
      %s21 = sshll.u32 [#allocation3], 4
      %s22 = int_to_ptr.vmem [resolvable:$true] %s21
      %27 = dma.hbm_to_vmem [thread:$0]  %s0, 256, %s22, [#allocation4], 128, 128, 8
    $region5: #{tpu_custom_call.1} parent=1 // pred_fallthru
      _
    // Predicated region
    $region6: #{tpu_custom_call.1} parent=1 // pred_check
      _
    $region7: #{tpu_custom_call.1} parent=1 // pred_check_branch
      %29 = sbr.rel (0) target = $region9
    $region8: #{tpu_custom_call.1} parent=1 // pred_region
      %s31 = ssub.s32 832, 832
      %32 = vsyncadd [#allocation7], %s31
      %s33 = sshll.u32 [#allocation6], 4
      %s34 = int_to_ptr.vmem [resolvable:$true] %s33
      %39 = dma.hbm_to_vmem [thread:$0]  %s1, 832, %s34, [#allocation7], 64, 64, 4
    $region9: #{tpu_custom_call.1} parent=1 // pred_fallthru
      _
    // Predicated region
    $region10: #{tpu_custom_call.1} parent=1 // pred_check
      _
    $region11: #{tpu_custom_call.1} parent=1 // pred_check_branch
      %41 = sbr.rel (0) target = $region13
    $region12: #{tpu_custom_call.1} parent=1 // pred_region
      _
    $region13: #{tpu_custom_call.1} parent=1 // pred_fallthru
      _
    // Predicated region
    $region14: #{tpu_custom_call.1} parent=1 // pred_check
      _
    $region15: #{tpu_custom_call.1} parent=1 // pred_check_branch
      %43 = sbr.rel (0) target = $region17
    $region16: #{tpu_custom_call.1} parent=1 // pred_region
      %s45 = ssub.s32 1024, 1024
      %46 = vsyncadd [#allocation7], %s45
      %s47 = sshll.u32 [#allocation8], 4
      %s48 = int_to_ptr.vmem [resolvable:$true] %s47
      %53 = dma.hbm_to_vmem [thread:$0]  %s3, 1024, %s48, [#allocation7], 64, 64, 4
    $region17: #{tpu_custom_call.1} parent=1 // pred_fallthru
      _
    // Predicated region
    $region18: #{tpu_custom_call.1} parent=1 // pred_check
      _
    $region19: #{tpu_custom_call.1} parent=1 // pred_check_branch
      %55 = sbr.rel (0) target = $region21
    $region20: #{tpu_custom_call.1} parent=1 // pred_region
      _
    $region21: #{tpu_custom_call.1} parent=1 // pred_fallthru
      _
    // Predicated region
    $region22: #{tpu_custom_call.1} parent=1 // pred_check
      _
    $region23: #{tpu_custom_call.1} parent=1 // pred_check_branch
      %57 = sbr.rel (0) target = $region25
    $region24: #{tpu_custom_call.1} parent=1 // pred_region
      _
    $region25: #{tpu_custom_call.1} parent=1 // pred_fallthru
      _
    // Predicated region
    $region26: #{tpu_custom_call.1} parent=1 // pred_check
      _
    $region27: #{tpu_custom_call.1} parent=1 // pred_check_branch
      %59 = sbr.rel (0) target = $region29
    $region28: #{tpu_custom_call.1} parent=1 // pred_region
      _
    $region29: #{tpu_custom_call.1} parent=1 // pred_fallthru
      _
    // Predicated region
    $region30: #{tpu_custom_call.1} parent=1 // pred_check
      _
    $region31: #{tpu_custom_call.1} parent=1 // pred_check_branch
      %61 = sbr.rel (0) target = $region33
    $region32: #{tpu_custom_call.1} parent=1 // pred_region
      %62 = dma.done [#allocation4], 256
    $region33: #{tpu_custom_call.1} parent=1 // pred_fallthru
      _
    // Predicated region
    $region34: #{tpu_custom_call.1} parent=1 // pred_check
      _
    $region35: #{tpu_custom_call.1} parent=1 // pred_check_branch
      %64 = sbr.rel (0) target = $region37
    $region36: #{tpu_custom_call.1} parent=1 // pred_region
      %65 = dma.done [#allocation7], 832
    $region37: #{tpu_custom_call.1} parent=1 // pred_fallthru
      _
    // Predicated region
    $region38: #{tpu_custom_call.1} parent=1 // pred_check
      _
    $region39: #{tpu_custom_call.1} parent=1 // pred_check_branch
      %67 = sbr.rel (0) target = $region41
    $region40: #{tpu_custom_call.1} parent=1 // pred_region
      %68 = dma.done [#allocation7], 1024
    $region41: #{tpu_custom_call.1} parent=1 // pred_fallthru
      _
    %v70 = vld [vmem:[#allocation3] sm:$0xff]
    %v71 = vld [vmem:[#allocation3 + $0x8] sm:$0xff]
    %v72 = vpack.c.bf16 %v71, %v70
    %v73 = vld [vmem:[#allocation6] sm:$0xf]
    %v74 = vld [vmem:[#allocation6 + $0x4] sm:$0xf]
    %v75 = vld [vmem:[#allocation6 + $0x8] sm:$0xf]
    %v76 = vld [vmem:[#allocation6 + $0xc] sm:$0xf]
    %v77 = vld [vmem:[#allocation6 + $0x10] sm:$0xf]
    %v78 = vld [vmem:[#allocation6 + $0x14] sm:$0xf]
    %v79 = vld [vmem:[#allocation6 + $0x18] sm:$0xf]
    %v80 = vld [vmem:[#allocation6 + $0x1c] sm:$0xf]
    %v81 = vld [vmem:[#allocation6 + $0x20] sm:$0xf]
    %v82 = vld [vmem:[#allocation6 + $0x24] sm:$0xf]
    %v83 = vld [vmem:[#allocation6 + $0x28] sm:$0xf]
    %v84 = vld [vmem:[#allocation6 + $0x2c] sm:$0xf]
    %v85 = vld [vmem:[#allocation6 + $0x30] sm:$0x1]
    %v86 = vld [vmem:[%s2] sm:$0x1]
    %v88 = vlaneseq
    %v89 = vshrl.u32 %v88, 7
    %v90 = vsub.s32 0, %v89
    %v91 = vrot.slane %v86, %v90
    %v106 = vunpack.c.l.b16 %v73
    %v107 = vunpack.c.l.b16 %v74
    %v108 = vunpack.c.l.b16 %v75
    %v109 = vunpack.c.l.b16 %v76
    %v110 = vunpack.c.l.b16 %v77
    %v111 = vunpack.c.l.b16 %v78
    %v112 = vunpack.c.l.b16 %v79
    %v113 = vunpack.c.l.b16 %v80
    %v114 = vunpack.c.l.b16 %v81
    %v115 = vunpack.c.l.b16 %v82
    %v116 = vunpack.c.l.b16 %v83
    %v117 = vunpack.c.l.b16 %v84
    %v118 = vunpack.c.l.b16 %v85
    %v119 = vpack.c.b16 %v107, %v106
    %v120 = vpack.c.b16 %v109, %v108
    %v121 = vpack.c.b16 %v111, %v110
    %v122 = vpack.c.b16 %v113, %v112
    %v123 = vpack.c.b16 %v115, %v114
    %v124 = vpack.c.b16 %v117, %v116
    %v125 = vpack.c.b16 %v118, %v118
    %vm132 = vcmask 801792
    %v134 = vsel %vm132, %v72, 0
    %vm136 = vcmask 1040384
    %v138 = vsel %vm136, %v125, 0
    %140 = vmatprep.subr.bf16.mxu0 0
    %141 = vmatpush1.bf16.msra.mxu0 0
    %142 = vmatprep.subr.bf16.mxu0 0
    %143 = vmatpush1.bf16.msra.mxu0 %v138
    %144 = vmatprep.subr.bf16.mxu0 0
    %145 = vmatpush1.bf16.msra.mxu0 %v124
    %146 = vmatprep.subr.bf16.mxu0 0
    %147 = vmatpush1.bf16.msra.mxu0 %v123
    %148 = vmatprep.subr.bf16.mxu0 0
    %149 = vmatpush1.bf16.msra.mxu0 %v122
    %150 = vmatprep.subr.bf16.mxu0 0
    %151 = vmatpush1.bf16.msra.mxu0 %v121
    %152 = vmatprep.subr.bf16.mxu0 0
    %153 = vmatpush1.bf16.msra.mxu0 %v120
    %154 = vmatprep.subr.bf16.mxu0 0
    %155 = vmatpush1.bf16.msra.mxu0 %v119
    %156 = vmatprep.subr.bf16.mxu0 0
    %157 = vmatpush2.bf16.msra.mxu0 0
    %158 = vmatprep.subr.bf16.mxu0 0
    %159 = vmatpush2.bf16.msra.mxu0 0
    %160 = vmatprep.subr.bf16.mxu0 0
    %161 = vmatpush2.bf16.msra.mxu0 0
    %162 = vmatprep.subr.bf16.mxu0 0
    %163 = vmatpush2.bf16.msra.mxu0 0
    %164 = vmatprep.subr.bf16.mxu0 0
    %165 = vmatpush2.bf16.msra.mxu0 0
    %166 = vmatprep.subr.bf16.mxu0 0
    %167 = vmatpush2.bf16.msra.mxu0 0
    %168 = vmatprep.subr.bf16.mxu0 0
    %169 = vmatpush2.bf16.msra.mxu0 0
    %170 = vmatprep.subr.bf16.mxu0 0
    %171 = vmatpush2.bf16.msra.mxu0 0
    %172 = vmatprep.mubr.bf16.mxu0 0
    %173 = vmatmul.mubr.bf16.gmra.mxu0 %v134
    %v174 = vpop.f32.mrf.mxu0
    %v175 = vadd.f32 %v91, %v174
    %v176 = vpop.f32.mrf.mxu0
    %v177 = vpop.f32.mrf.mxu0
    %v178 = vadd.f32 %v91, %v177
    %v179 = vpop.f32.mrf.mxu0
    %180 = vdwg.mxu0
    %v181 = vmax.f32 %v175, 0.0
    %v182 = vmax.f32 %v178, 0.0
    %v183 = vpack.c.bf16 %v182, %v181
    %v184 = vld [vmem:[#allocation8] sm:$0xf]
    %v185 = vld [vmem:[#allocation8 + $0x4] sm:$0xf]
    %v186 = vld [vmem:[#allocation8 + $0x8] sm:$0xf]
    %v187 = vld [vmem:[#allocation8 + $0xc] sm:$0xf]
    %v188 = vld [vmem:[#allocation8 + $0x10] sm:$0xf]
    %v189 = vld [vmem:[#allocation8 + $0x14] sm:$0xf]
    %v190 = vld [vmem:[#allocation8 + $0x18] sm:$0xf]
    %v191 = vld [vmem:[#allocation8 + $0x1c] sm:$0xf]
    %v192 = vld [vmem:[#allocation8 + $0x20] sm:$0xf]
    %v193 = vld [vmem:[#allocation8 + $0x24] sm:$0xf]
    %v194 = vld [vmem:[#allocation8 + $0x28] sm:$0xf]
    %v195 = vld [vmem:[#allocation8 + $0x2c] sm:$0xf]
    %v196 = vld [vmem:[#allocation8 + $0x30] sm:$0xf]
    %v197 = vld [vmem:[#allocation8 + $0x34] sm:$0xf]
    %v198 = vld [vmem:[#allocation8 + $0x38] sm:$0xf]
    %v199 = vld [vmem:[#allocation8 + $0x3c] sm:$0xf]
    %v200 = vld [vmem:[%s4] sm:$0x1]
    %v202 = vlaneseq
    %v203 = vshrl.u32 %v202, 7
    %v204 = vsub.s32 0, %v203
    %v205 = vrot.slane %v200, %v204
    %v223 = vunpack.c.l.b16 %v184
    %v224 = vunpack.c.l.b16 %v185
    %v225 = vunpack.c.l.b16 %v186
    %v226 = vunpack.c.l.b16 %v187
    %v227 = vunpack.c.l.b16 %v188
    %v228 = vunpack.c.l.b16 %v189
    %v229 = vunpack.c.l.b16 %v190
    %v230 = vunpack.c.l.b16 %v191
    %v231 = vunpack.c.l.b16 %v192
    %v232 = vunpack.c.l.b16 %v193
    %v233 = vunpack.c.l.b16 %v194
    %v234 = vunpack.c.l.b16 %v195
    %v235 = vunpack.c.l.b16 %v196
    %v236 = vunpack.c.l.b16 %v197
    %v237 = vunpack.c.l.b16 %v198
    %v238 = vunpack.c.l.b16 %v199
    %v239 = vpack.c.b16 %v224, %v223
    %v240 = vpack.c.b16 %v226, %v225
    %v241 = vpack.c.b16 %v228, %v227
    %v242 = vpack.c.b16 %v230, %v229
    %v243 = vpack.c.b16 %v232, %v231
    %v244 = vpack.c.b16 %v234, %v233
    %v245 = vpack.c.b16 %v236, %v235
    %v246 = vpack.c.b16 %v238, %v237
    %255 = vmatprep.subr.bf16.mxu0 0
    %256 = vmatpush1.bf16.msra.mxu0 %v246
    %257 = vmatprep.subr.bf16.mxu0 0
    %258 = vmatpush1.bf16.msra.mxu0 %v245
    %259 = vmatprep.subr.bf16.mxu0 0
    %260 = vmatpush1.bf16.msra.mxu0 %v244
    %261 = vmatprep.subr.bf16.mxu0 0
    %262 = vmatpush1.bf16.msra.mxu0 %v243
    %263 = vmatprep.subr.bf16.mxu0 0
    %264 = vmatpush1.bf16.msra.mxu0 %v242
    %265 = vmatprep.subr.bf16.mxu0 0
    %266 = vmatpush1.bf16.msra.mxu0 %v241
    %267 = vmatprep.subr.bf16.mxu0 0
    %268 = vmatpush1.bf16.msra.mxu0 %v240
    %269 = vmatprep.subr.bf16.mxu0 0
    %270 = vmatpush1.bf16.msra.mxu0 %v239
    %271 = vmatprep.subr.bf16.mxu0 0
    %272 = vmatpush2.bf16.msra.mxu0 0
    %273 = vmatprep.subr.bf16.mxu0 0
    %274 = vmatpush2.bf16.msra.mxu0 0
    %275 = vmatprep.subr.bf16.mxu0 0
    %276 = vmatpush2.bf16.msra.mxu0 0
    %277 = vmatprep.subr.bf16.mxu0 0
    %278 = vmatpush2.bf16.msra.mxu0 0
    %279 = vmatprep.subr.bf16.mxu0 0
    %280 = vmatpush2.bf16.msra.mxu0 0
    %281 = vmatprep.subr.bf16.mxu0 0
    %282 = vmatpush2.bf16.msra.mxu0 0
    %283 = vmatprep.subr.bf16.mxu0 0
    %284 = vmatpush2.bf16.msra.mxu0 0
    %285 = vmatprep.subr.bf16.mxu0 0
    %286 = vmatpush2.bf16.msra.mxu0 0
    %287 = vmatprep.mubr.bf16.mxu0 0
    %288 = vmatmul.mubr.bf16.gmra.mxu0 %v183
    %v289 = vpop.f32.mrf.mxu0
    %v290 = vadd.f32 %v205, %v289
    %v291 = vpop.f32.mrf.mxu0
    %v292 = vpop.f32.mrf.mxu0
    %v293 = vadd.f32 %v205, %v292
    %v294 = vpop.f32.mrf.mxu0
    %295 = vdwg.mxu0
    %v296 = vmax.f32 %v290, 0.0
    %v297 = vmax.f32 %v293, 0.0
    %v298 = vld [vmem:[%s5] sm:$0x1]
    %v299 = vpack.c.bf16 %v297, %v296
    %s300 = sld [smem:[#allocation2]]
    %v301 = vstv %s300
    %302 = vmatprep.subr.bf16.mxu0 0
    %303 = vmatpush1.bf16.xpose.msra.mxu0 0
    %304 = vmatprep.subr.bf16.mxu0 0
    %305 = vmatpush1.bf16.xpose.msra.mxu0 0
    %306 = vmatprep.subr.bf16.mxu0 0
    %307 = vmatpush1.bf16.xpose.msra.mxu0 0
    %308 = vmatprep.subr.bf16.mxu0 0
    %309 = vmatpush1.bf16.xpose.msra.mxu0 0
    %310 = vmatprep.subr.bf16.mxu0 0
    %311 = vmatpush1.bf16.xpose.msra.mxu0 0
    %312 = vmatprep.subr.bf16.mxu0 0
    %313 = vmatpush1.bf16.xpose.msra.mxu0 0
    %314 = vmatprep.subr.bf16.mxu0 0
    %315 = vmatpush1.bf16.xpose.msra.mxu0 0
    %316 = vmatprep.subr.bf16.mxu0 0
    %317 = vmatpush1.bf16.xpose.msra.mxu0 %v299
    %318 = vmatprep.subr.bf16.mxu0 0
    %319 = vmatpush2.bf16.xpose.msra.mxu0 0
    %320 = vmatprep.subr.bf16.mxu0 0
    %321 = vmatpush2.bf16.xpose.msra.mxu0 0
    %322 = vmatprep.subr.bf16.mxu0 0
    %323 = vmatpush2.bf16.xpose.msra.mxu0 0
    %324 = vmatprep.subr.bf16.mxu0 0
    %325 = vmatpush2.bf16.xpose.msra.mxu0 0
    %326 = vmatprep.subr.bf16.mxu0 0
    %327 = vmatpush2.bf16.xpose.msra.mxu0 0
    %328 = vmatprep.subr.bf16.mxu0 0
    %329 = vmatpush2.bf16.xpose.msra.mxu0 0
    %330 = vmatprep.subr.bf16.mxu0 0
    %331 = vmatpush2.bf16.xpose.msra.mxu0 0
    %332 = vmatprep.subr.bf16.mxu0 0
    %333 = vmatpush2.bf16.xpose.msra.mxu0 0
    %334 = vmatprep.mubr.bf16.mxu0 0
    %335 = vmatmul.mubr.bf16.gmra.mxu0 %v298
    %v336 = vpop.f32.mrf.mxu0
    %v337 = vadd.f32 %v301, %v336
    %v338 = vpop.f32.mrf.mxu0
    %v339 = vpop.f32.mrf.mxu0
    %v340 = vpop.f32.mrf.mxu0
    %341 = vdwg.mxu0
    %v342 = vsub.f32 0.0, %v337
    %v343 = vmul.f32 %v342, 1.442695
    %v344 = vpow.pop %v343
    %v345 = vadd.f32 %v344, 1.0
    %v346 = vrcp.pop %v345
    %vm347 = vcmask 122880
    %348 = vst.msk [vmem:[#allocation9] sm:$0x1] %vm347, %v346
    // Predicated region
    $region42: #{tpu_custom_call.1} parent=1 // pred_check
      _
    $region43: #{tpu_custom_call.1} parent=1 // pred_check_branch
      %350 = sbr.rel (0) target = $region45
    $region44: #{tpu_custom_call.1} parent=1 // pred_region
      %s352 = ssub.s32 16, 16
      %353 = vsyncadd [#allocation5], %s352
      %s355 = sshll.u32 [#allocation9], 4
      %s356 = int_to_ptr.vmem [resolvable:$true] %s355
      %358 = dma.vmem_to_hbm [thread:$0]  %s356, 16, %s7, [#allocation5]
    $region45: #{tpu_custom_call.1} parent=1 // pred_fallthru
      _
    // Predicated region
    $region46: #{tpu_custom_call.1} parent=1 // pred_check
      _
    $region47: #{tpu_custom_call.1} parent=1 // pred_check_branch
      %360 = sbr.rel (0) target = $region49
    $region48: #{tpu_custom_call.1} parent=1 // pred_region
      %361 = dma.done [#allocation5], 16
    $region49: #{tpu_custom_call.1} parent=1 // pred_fallthru
      _
    %362 = vsyncpa [#allocation4], 1
    %363 = vsyncpa [#allocation7], 1
    %364 = vsyncpa [#allocation5], 1

</llo_original>
